<compile_context>
chip_gen: v5e
topology: v5e:2x2
jax: 0.10.0
libtpu: 0.0.40
codegen_flags: <defaults>
</compile_context>

<pallas_src>
import functools

import jax
import jax.numpy as jnp
from jax.experimental import pallas as pl
from jax.experimental.pallas import tpu as pltpu

HIDDEN = 1024  # Mlps(1, [1024]) / Mlps(1024, [1024]) width from the module __init__


# ---------------------------------------------------------------------------
# Kernel 1: tiled per-batch gram matrix  G[b] = X[b] @ X[b]^T
#   xr_ref : (1, tm, C)  row block              (LHS, [M, K])
#   xt_ref : (1, C, tn)  lane-dense column block (RHS, [K, N]; x transposed once in XLA)
#   g_ref  : (1, tm, tn)
# ---------------------------------------------------------------------------
def gram_kernel(xr_ref, xt_ref, g_ref):
    g_ref[0] = jnp.dot(xr_ref[0], xt_ref[0], preferred_element_type=jnp.float32)


def _gram_tile(n):
    # K = C is tiny, so each grid step is per-step-overhead / writeback bound: prefer the
    # biggest tile that still fits comfortably (1024^2 f32 output = 4 MiB per buffer).
    for t in (1024, 512, 256, 128):
        if n % t == 0:
            return t
    return n  # small / odd N: full-extent block (block == array dim is always legal)


def compute_gram_matrix(x_bnc):
    B, N, C = x_bnc.shape
    tm = tn = _gram_tile(N)
    x_t = jnp.swapaxes(x_bnc, -2, -1)  # (B, C, N): one-time XLA transpose, lane-dense RHS
    return pl.pallas_call(
        gram_kernel,
        out_shape=jax.ShapeDtypeStruct((B, N, N), jnp.float32),
        grid=(B, N // tm, N // tn),
        in_specs=[
            pl.BlockSpec((1, tm, C), lambda b, i, j: (b, i, 0)),
            pl.BlockSpec((1, C, tn), lambda b, i, j: (b, 0, j)),
        ],
        out_specs=pl.BlockSpec((1, tm, tn), lambda b, i, j: (b, i, j)),
        compiler_params=pltpu.CompilerParams(
            dimension_semantics=("parallel", "parallel", "parallel")),
    )(x_bnc, x_t)


# ---------------------------------------------------------------------------
# Kernel 2: fused q_mlps + softmax(over N) + abs-difference combine + a_mlps,
# processed one batch block x one hidden-dim chunk per grid step.
#   ev_ref : (bb, N, 3)  col 0 = 3rd-largest, 1 = 2nd-largest, 2 = largest eigvec
#   wq_ref : (1, Hc) f32  -- Mlps(1, [1024]) weight chunk (1x1 conv)
#   bq_ref : (1, Hc) f32  -- Mlps(1, [1024]) bias chunk
#   wa_ref : (Hc, H) bf16 -- Mlps(1024,[1024]) weight rows for this chunk
#   ba_ref : (1, H)  f32  -- Mlps(1024,[1024]) bias
#   out_ref: (bb, N, H) f32
#   acc_ref: (bb*N, H) f32 VMEM accumulator, live across the H-chunk (reduction) axis
# ---------------------------------------------------------------------------
def gsn_kernel(ev_ref, wq_ref, bq_ref, wa_ref, ba_ref, out_ref, acc_ref, *, ew_dtype):
    h = pl.program_id(1)

    @pl.when(h == 0)
    def _():
        acc_ref[...] = jnp.zeros_like(acc_ref)

    bb, N, _ = ev_ref.shape
    Hc = wq_ref.shape[-1]

    ev = ev_ref[...].astype(ew_dtype)                      # (bb, N, 3)
    wq = wq_ref[...].astype(ew_dtype).reshape(1, 1, Hc)    # hoisted: shared by all 3 branches
    bq = bq_ref[...].astype(ew_dtype).reshape(1, 1, Hc)

    def branch(c):
        # conv1x1 (1 -> Hc channels) + ReLU of one eigenvector, then softmax over the
        # N (points) axis.  Softmax over N is per-channel, so H-chunking is exact.
        v = ev[:, :, c:c + 1]                              # (bb, N, 1)
        pre = jnp.maximum(v * wq + bq, 0.0)                # (bb, N, Hc)
        m = jnp.max(pre.astype(jnp.float32), axis=1, keepdims=True)   # f32 reduce
        e = jnp.exp(pre - m.astype(ew_dtype))              # EUP exp (bf16 on v6e/v7x)
        s = jnp.sum(e, axis=1, keepdims=True, dtype=jnp.float32)      # f32 reduce
        return e * pl.reciprocal(s, approx=True).astype(ew_dtype)

    q1 = branch(2)                                         # largest eigenvector
    q2 = branch(1)
    q3 = branch(0)
    d = jnp.abs(q1 - q2) - jnp.abs(q2 - q3) - jnp.abs(q3 - q1)        # (bb, N, Hc)

    # Mlps(1024,[1024]) partial product for this H chunk: flatten batch into M so the
    # MXU sees bb*N rows; bf16 operands, f32 accumulation.
    d2 = d.reshape(bb * N, Hc).astype(jnp.bfloat16)
    acc_ref[...] += jnp.dot(d2, wa_ref[...], preferred_element_type=jnp.float32)

    @pl.when(h == pl.num_programs(1) - 1)
    def _():
        a = acc_ref[...] + ba_ref[...]                                # (bb*N, H)
        out_ref[...] = jnp.maximum(a, 0.0).reshape(out_ref.shape).astype(out_ref.dtype)


# ---------------------------------------------------------------------------
# Sizing helpers (generation-aware)
# ---------------------------------------------------------------------------
def _vmem_capacity_bytes():
    try:
        return int(pltpu.get_tpu_info().vmem_capacity_bytes)
    except Exception:
        return 64 << 20          # conservative fallback (v7x physical VMEM per TC)


def _elementwise_dtype():
    # bf16 VPU/EUP exist on v6e / v7x (2x elements per vreg, half the intermediate VMEM);
    # v5e has no bf16 VPU/EUP so bf16 elementwise would only add converts.
    kind = jax.devices()[0].device_kind.lower()
    if "v6" in kind or "v7" in kind or "7x" in kind:
        return jnp.bfloat16
    return jnp.float32


def _pick_hidden_chunk(H):
    for hc in (256, 128):
        if H % hc == 0:
            return hc
    return H


def _gsn_block_bytes(bb, N, H, Hc, ew_bytes):
    out_buf = 2 * bb * N * H * 4            # double-buffered f32 output block
    acc = bb * N * H * 4                    # f32 accumulator scratch
    mm_tmp = bb * N * H * 4                 # f32 matmul result before += into acc
    wa_buf = 2 * Hc * H * 2                 # double-buffered bf16 weight chunk
    ev_buf = 2 * bb * N * 128 * 4           # (bb, N, 3) block, lane-padded to 128
    inter = 6 * bb * N * Hc * ew_bytes      # pre / e / q1 / q2 / q3 / d temporaries
    misc = 1 << 20
    return out_buf + acc + mm_tmp + wa_buf + ev_buf + inter + misc


def _choose_batch_block(B, N, H, Hc, ew_bytes, budget_bytes):
    bb = 1
    for d in range(1, B + 1):
        if B % d == 0 and _gsn_block_bytes(d, N, H, Hc, ew_bytes) <= budget_bytes:
            bb = d
    if B >= 2:
        # keep >= 2 parallel steps on the batch grid axis so a 2-TensorCore chip (v7x)
        # can shard it; negligible per-step overhead cost on 1-TC chips (v5e/v6e).
        bb = min(bb, B // 2)
        while B % bb:
            bb -= 1
    return max(bb, 1)


# ---------------------------------------------------------------------------
# Wrappers
# ---------------------------------------------------------------------------
def init_params(key, hidden=HIDDEN, dtype=jnp.float32):
    """Deterministic synthetic parameters (shapes from Mlps(1,[H]) and Mlps(H,[H]))."""
    k1, k2, k3, k4 = jax.random.split(key, 4)
    wq = jax.random.normal(k1, (1, hidden), dtype)                          # Conv1d(1, H, 1).weight
    bq = 0.1 * jax.random.normal(k2, (1, hidden), dtype)                    # Conv1d(1, H, 1).bias
    wa = jax.random.normal(k3, (hidden, hidden), dtype) / jnp.sqrt(hidden)  # Conv1d(H, H, 1).weight
    ba = 0.1 * jax.random.normal(k4, (1, hidden), dtype)                    # Conv1d(H, H, 1).bias
    return wq, bq, wa, ba


def global_structure_network(x, params, fmt="BNC"):
    # layout: 'BNC' input is (B, N, C); 'BCN' input is (B, C, N). Output: (B, N, HIDDEN).
    wq, bq, wa, ba = params
    x_bnc = jnp.swapaxes(x, -2, -1) if fmt == "BCN" else x
    x_bnc = x_bnc.astype(jnp.float32)
    B, N, _ = x_bnc.shape
    H = wq.shape[-1]

    gram = compute_gram_matrix(x_bnc)                       # (B, N, N)

    # TODO(synk): symmetric eigendecomposition has no Pallas TPU primitive; done in plain
    # JAX.  For large N this eigh dominates wall clock; a top-3 block power iteration built
    # on the Pallas matmul would be the next step.
    # NOTE: eigh eigenvector signs/ordering of (near-)degenerate eigenvalues are arbitrary,
    # and ReLU+softmax is not sign-invariant — the PyTorch reference has the same ambiguity.
    _, eigvecs = jnp.linalg.eigh(gram)                      # ascending eigenvalues, column vecs
    top3 = eigvecs[:, :, -3:]                               # (B, N, 3); column 2 = largest

    ew_dtype = _elementwise_dtype()
    ew_bytes = jnp.dtype(ew_dtype).itemsize
    Hc = _pick_hidden_chunk(H)
    cap = _vmem_capacity_bytes()
    bb = _choose_batch_block(B, N, H, Hc, ew_bytes, int(cap * 0.7))
    block_bytes = _gsn_block_bytes(bb, N, H, Hc, ew_bytes)
    vmem_limit = int(min(cap * 0.9, max(block_bytes * 1.25, 32 << 20)))

    wa_bf16 = wa.astype(jnp.bfloat16)                       # bf16 MXU operand; acc stays f32

    # NOTE: nn.Softmax(dim=1) is applied to the BNC output of Mlps(1,[1024]), i.e. the
    # softmax normalizes over the N (points) axis, matching a_mlps(..., format='BNC').
    kernel = functools.partial(gsn_kernel, ew_dtype=ew_dtype)
    out = pl.pallas_call(
        kernel,
        out_shape=jax.ShapeDtypeStruct((B, N, H), jnp.float32),
        grid=(B // bb, H // Hc),                            # minor axis = H-chunk reduction
        in_specs=[
            pl.BlockSpec((bb, N, 3), lambda i, h: (i, 0, 0)),    # eigenvectors (batch block)
            pl.BlockSpec((1, Hc), lambda i, h: (0, h)),          # wq chunk
            pl.BlockSpec((1, Hc), lambda i, h: (0, h)),          # bq chunk
            pl.BlockSpec((Hc, H), lambda i, h: (h, 0)),          # wa rows for this chunk (bf16)
            pl.BlockSpec((1, H), lambda i, h: (0, 0)),           # ba (broadcast)
        ],
        out_specs=pl.BlockSpec((bb, N, H), lambda i, h: (i, 0, 0)),
        scratch_shapes=[pltpu.VMEM((bb * N, H), jnp.float32)],
        compiler_params=pltpu.CompilerParams(
            dimension_semantics=("parallel", "arbitrary"),
            vmem_limit_bytes=vmem_limit),
    )(top3, wq, bq, wa_bf16, ba)
    return out


if __name__ == "__main__":
    key = jax.random.PRNGKey(0)
    k_x, k_p = jax.random.split(key)

    B, N, C = 2, 16, 4                                      # small BNC point cloud
    x = jax.random.normal(k_x, (B, N, C), jnp.float32)
    params = init_params(k_p)

    a_dp = global_structure_network(x, params, fmt="BNC")
    a_dp = jax.block_until_ready(a_dp)

    assert a_dp.shape == (B, N, HIDDEN)
    assert bool(jnp.all(jnp.isfinite(a_dp)))
    print("KERNEL_OK")
</pallas_src>

<mosaic_0001>
module attributes {stable_mosaic.version = 11 : i64} {
  func.func @gram_kernel(%arg0: i32, %arg1: i32, %arg2: i32, %arg3: memref<1x16x4xf32, #tpu.memory_space<vmem>>, %arg4: memref<1x4x16xf32, #tpu.memory_space<vmem>>, %arg5: memref<1x16x16xf32, #tpu.memory_space<vmem>>) attributes {dimension_semantics = [#tpu.dimension_semantics<parallel>, #tpu.dimension_semantics<parallel>, #tpu.dimension_semantics<parallel>], iteration_bounds = array<i64: 2, 1, 1>, scalar_prefetch = 0 : i64, scratch_operands = 0 : i64, tpu.core_type = #tpu.core_type<tc>, window_params = [{transform_indices = @transform_0, window_bounds = array<i64: 1, 16, 4>}, {transform_indices = @transform_1, window_bounds = array<i64: 1, 4, 16>}, {transform_indices = @transform_2, window_bounds = array<i64: 1, 16, 16>}]} {
    %c0 = arith.constant 0 : index
    %c0_0 = arith.constant 0 : index
    %c0_1 = arith.constant 0 : index
    %0 = vector.load %arg3[%c0, %c0_0, %c0_1] : memref<1x16x4xf32, #tpu.memory_space<vmem>>, vector<1x16x4xf32>
    %1 = vector.shape_cast %0 : vector<1x16x4xf32> to vector<16x4xf32>
    %c0_2 = arith.constant 0 : index
    %c0_3 = arith.constant 0 : index
    %c0_4 = arith.constant 0 : index
    %2 = vector.load %arg4[%c0_2, %c0_3, %c0_4] : memref<1x4x16xf32, #tpu.memory_space<vmem>>, vector<1x4x16xf32>
    %3 = vector.shape_cast %2 : vector<1x4x16xf32> to vector<4x16xf32>
    %cst = arith.constant dense<0.000000e+00> : vector<16x16xf32>
    %4 = tpu.matmul %1, %3, %cst {dimension_numbers = #tpu.dot_dimension_numbers<[1], [0], [0], [1], [0, 0, 1, 1], [], []>} : vector<16x4xf32>, vector<4x16xf32>, vector<16x16xf32> -> vector<16x16xf32>
    %c0_5 = arith.constant 0 : index
    %c0_6 = arith.constant 0 : index
    %c0_7 = arith.constant 0 : index
    %5 = vector.load %arg5[%c0_5, %c0_6, %c0_7] : memref<1x16x16xf32, #tpu.memory_space<vmem>>, vector<1x16x16xf32>
    %6 = vector.shape_cast %5 : vector<1x16x16xf32> to vector<16x16xf32>
    %7 = vector.shape_cast %4 : vector<16x16xf32> to vector<1x16x16xf32>
    tpu.vector_store %arg5[%c0_5, %c0_6, %c0_7], %7 {strides = array<i32>} : memref<1x16x16xf32, #tpu.memory_space<vmem>>, vector<1x16x16xf32>,
    return
  }
  func.func @transform_0(%arg0: i32, %arg1: i32, %arg2: i32) -> (i32, i32, i32) {
    %c0_i32 = arith.constant 0 : i32
    %c0_i32_0 = arith.constant 0 : i32
    return %arg0, %arg1, %c0_i32 : i32, i32, i32
  }
  func.func @transform_1(%arg0: i32, %arg1: i32, %arg2: i32) -> (i32, i32, i32) {
    %c0_i32 = arith.constant 0 : i32
    %c0_i32_0 = arith.constant 0 : i32
    return %arg0, %c0_i32, %arg2 : i32, i32, i32
  }
  func.func @transform_2(%arg0: i32, %arg1: i32, %arg2: i32) -> (i32, i32, i32) {
    %c0_i32 = arith.constant 0 : i32
    return %arg0, %arg1, %arg2 : i32, i32, i32
  }
}

</mosaic_0001>

<llo_original>
// kernel: tpu_custom_call.1
$region0: #{tpu_custom_call.1}
  #allocation0 [shape = 'u32[]', space=smem, size = 0x4, offset = 0x4, fixed_abs, tag = 'smem constant byte address 0x4 - core index']
  #allocation1 [shape = 'u32[72,128]{1,0:T(1,128)}', space=vmem, size = 0x9000, scoped, tag = 'internal scratch']
  %s0 = inlined_call_operand.vmem [shape: f32[2,16,4], index: 0, kind: input, shape index: {}]
  %s1 = inlined_call_operand.vmem [shape: f32[2,4,16], index: 1, kind: input, shape index: {}]
  %s2 = inlined_call_operand.hbm [shape: f32[2,16,16], index: 2, kind: output, shape index: {}]
  %s3 = sld [smem:[#allocation0]]
  $region41: #{tpu_custom_call.1} parent=0
    _
  %s5 = ssub.s32 1, %s3
  %s6 = scalar_select 0, %s5, %s3
  $region1: #{tpu_custom_call.1} parent=0
    #allocation2 [shape = 'u8[16384]{0}', space=vmem, size = 0x4000, scoped, tag = 'output window, operand 0']
    #allocation3 [shape = 's32[2]{0}', space=sflag, size = 0x8, scoped, tag = 'scoped memory for tpu_custom_call.1']
    %7 = vsyncpa [#allocation3], 0
    %s8 = scalar_lea.sflag [#allocation3], 1
    %9 = vsyncpa %s8, 0
    loop: start=0, step=1, limit=4
    $region2: #{tpu_custom_call.1} parent=1 // loop_pre_header
      _
    $region3: #{tpu_custom_call.1} parent=1 // loop_header
      %s11 = sphi 0, %s15
      %p12 = scmp.ge.s32.totalorder %s11, 4
      %s18 = sphi 0, %s37
      %s19 = sphi 0, %s33
      %s20 = sphi 0, %s29
      %s21 = sphi 0, %s18
      %s22 = sphi 0, %s19
      %s23 = sphi 0, %s20
      %s24 = sphi 0, %s21
      %s25 = sphi 0, %s22
      %s26 = sphi 0, %s23
      %s42 = sphi 0, %s44
      %s45 = sphi 0, %s42
      %s46 = sphi 0, %s45
      %s62 = sphi 0, %s46
      %s70 = sphi 0, %s72
      %s73 = sphi 0, %s70
      %s74 = sphi 0, %s73
      %s90 = sphi 0, %s74
      %s100 = sphi 0, %s102
      %s103 = sphi 0, %s100
      %s104 = sphi 0, %s103
      %s120 = sphi 0, %s104
    $region4: #{tpu_custom_call.1} parent=1 // loop_header_branch
      %14 = sbr.rel (%p12) target = $region8
    $region5: #{tpu_custom_call.1} parent=1 // loop_body
      %s16 = ssub.s32 %s11, 1
      %s17 = ssub.s32 %s11, 2
      %s27 = sadd.s32 1, %s20
      %p28 = scmp.ge.s32.totalorder %s27, 1
      %s29 = scalar_select %p28, 0, %s27
      %s30 = sadd.s32 1, %s19
      %s31 = scalar_select %p28, %s30, %s19
      %p32 = scmp.ge.s32.totalorder %s31, 1
      %s33 = scalar_select %p32, 0, %s31
      %s34 = sadd.s32 1, %s18
      %s35 = scalar_select %p32, %s34, %s18
      %p36 = scmp.ge.s32.totalorder %s35, 2
      %s37 = scalar_select %p36, 0, %s35
      %s38 = ssub.s32 %s18, %s37
      %s39 = ssub.s32 %s19, %s33
      %s40 = sor.u32 %s38, %s39
      %p41 = scmp.eq.s32.totalorder %s40, 0
      %s43 = sadd.s32 %s42, 1
      %s44 = scalar_select %p41, %s42, %s43
      %p47 = pneg %p41
      %p48 = scmp.eq.s32.totalorder %s11, 1
      %p49 = por %p47, %p48
      %p50 = scmp.ne.s32.totalorder %s42, %s45
      %p51 = scmp.eq.s32.totalorder %s11, 0
      %p52 = por %p50, %p51
      %p53 = scmp.ne.s32.totalorder %s42, %s45
      %p54 = scmp.eq.s32.totalorder %s16, 1
      %p55 = por %p53, %p54
      %p56 = scmp.ne.s32.totalorder %s45, %s46
      %p57 = scmp.eq.s32.totalorder %s16, 0
      %p58 = por %p56, %p57
      %p59 = scmp.ne.s32.totalorder %s45, %s46
      %p60 = scmp.eq.s32.totalorder %s17, 1
      %p61 = por %p59, %p60
      %p63 = scmp.ne.s32.totalorder %s46, %s62
      %p64 = scmp.eq.s32.totalorder %s17, 0
      %p65 = por %p63, %p64
      %s66 = ssub.s32 %s18, %s37
      %s67 = ssub.s32 %s20, %s29
      %s68 = sor.u32 %s66, %s67
      %p69 = scmp.eq.s32.totalorder %s68, 0
      %s71 = sadd.s32 %s70, 1
      %s72 = scalar_select %p69, %s70, %s71
      %p75 = pneg %p69
      %p76 = scmp.eq.s32.totalorder %s11, 1
      %p77 = por %p75, %p76
      %p78 = scmp.ne.s32.totalorder %s70, %s73
      %p79 = scmp.eq.s32.totalorder %s11, 0
      %p80 = por %p78, %p79
      %p81 = scmp.ne.s32.totalorder %s70, %s73
      %p82 = scmp.eq.s32.totalorder %s16, 1
      %p83 = por %p81, %p82
      %p84 = scmp.ne.s32.totalorder %s73, %s74
      %p85 = scmp.eq.s32.totalorder %s16, 0
      %p86 = por %p84, %p85
      %p87 = scmp.ne.s32.totalorder %s73, %s74
      %p88 = scmp.eq.s32.totalorder %s17, 1
      %p89 = por %p87, %p88
      %p91 = scmp.ne.s32.totalorder %s74, %s90
      %p92 = scmp.eq.s32.totalorder %s17, 0
      %p93 = por %p91, %p92
      %s94 = ssub.s32 %s18, %s37
      %s95 = ssub.s32 %s19, %s33
      %s96 = sor.u32 %s94, %s95
      %s97 = ssub.s32 %s20, %s29
      %s98 = sor.u32 %s96, %s97
      %p99 = scmp.eq.s32.totalorder %s98, 0
      %s101 = sadd.s32 %s100, 1
      %s102 = scalar_select %p99, %s100, %s101
      %p105 = pneg %p99
      %p106 = scmp.eq.s32.totalorder %s11, 1
      %p107 = por %p105, %p106
      %p108 = scmp.ne.s32.totalorder %s100, %s103
      %p109 = scmp.eq.s32.totalorder %s11, 0
      %p110 = por %p108, %p109
      %p111 = scmp.ne.s32.totalorder %s100, %s103
      %p112 = scmp.eq.s32.totalorder %s16, 1
      %p113 = por %p111, %p112
      %p114 = scmp.ne.s32.totalorder %s103, %s104
      %p115 = scmp.eq.s32.totalorder %s16, 0
      %p116 = por %p114, %p115
      %p117 = scmp.ne.s32.totalorder %s103, %s104
      %p118 = scmp.eq.s32.totalorder %s17, 1
      %p119 = por %p117, %p118
      %p121 = scmp.ne.s32.totalorder %s104, %s120
      %p122 = scmp.eq.s32.totalorder %s17, 0
      %p123 = por %p121, %p122
      %p124 = scmp.le.s32.totalorder 1, %s11
      %p125 = scmp.lt.s32.totalorder %s11, 3
      %p126 = pnand %p124, %p125
      %p127 = pneg %p126
      // Predicated region
      $region9: #{tpu_custom_call.1} parent=5 // pred_check
        _
      $region10: #{tpu_custom_call.1} parent=5 // pred_check_branch
        %129 = sbr.rel (%p126) target = $region12
      $region11: #{tpu_custom_call.1} parent=5 // pred_region
        %s130 = ssub.s32 %s11, 1
      $region12: #{tpu_custom_call.1} parent=5 // pred_fallthru
        _
      %p131 = scmp.lt.s32.totalorder %s11, 2
      // Predicated region
      $region13: #{tpu_custom_call.1} parent=5 // pred_check
        %p132 = pneg %p131
      $region14: #{tpu_custom_call.1} parent=5 // pred_check_branch
        %134 = sbr.rel (%p132) target = $region16
      $region15: #{tpu_custom_call.1} parent=5 // pred_region
        // Predicated region
        $region17: #{tpu_custom_call.1} parent=15 // pred_check
          %p135 = pneg %p52
        $region18: #{tpu_custom_call.1} parent=15 // pred_check_branch
          %137 = sbr.rel (%p135) target = $region20
        $region19: #{tpu_custom_call.1} parent=15 // pred_region
          %s138 = smul.u32 2, %s19
          %p139 = scmp.lt.s32.totalorder %s18, 1
          %s140 = scalar_select %p139, %s18, 1
          %p141 = scmp.lt.s32.totalorder %s138, 1
          %s142 = scalar_select %p141, %s138, 1
          %s143 = smul.addr %s140, 2
          %s144 = sadd.s32 %s142, %s143
          %s145 = smul.addr %s144, 8
          %s146 = scalar_lea.vmem %s0, %s145
          %s147 = smul.u32 2, %s19
        $region20: #{tpu_custom_call.1} parent=15 // pred_fallthru
          _
        // Predicated region
        $region21: #{tpu_custom_call.1} parent=15 // pred_check
          %p148 = pneg %p80
        $region22: #{tpu_custom_call.1} parent=15 // pred_check_branch
          %150 = sbr.rel (%p148) target = $region24
        $region23: #{tpu_custom_call.1} parent=15 // pred_region
          %p151 = scmp.lt.s32.totalorder %s18, 1
          %s152 = scalar_select %p151, %s18, 1
          %p153 = scmp.lt.s32.totalorder %s20, 0
          %s154 = scalar_select %p153, %s20, 0
          %s155 = sadd.s32 %s154, %s152
          %s156 = smul.addr %s155, 4
          %s157 = scalar_lea.vmem %s1, %s156
        $region24: #{tpu_custom_call.1} parent=15 // pred_fallthru
          _
      $region16: #{tpu_custom_call.1} parent=5 // pred_fallthru
        _
      %p158 = scmp.le.s32.totalorder 1, %s11
      %p159 = scmp.lt.s32.totalorder %s11, 3
      %p160 = pnand %p158, %p159
      %p161 = pneg %p160
      // Predicated region
      $region25: #{tpu_custom_call.1} parent=5 // pred_check
        _
      $region26: #{tpu_custom_call.1} parent=5 // pred_check_branch
        %163 = sbr.rel (%p160) target = $region28
      $region27: #{tpu_custom_call.1} parent=5 // pred_region
        %s164 = ssub.s32 %s11, 1
        %s165 = smul.u32 2, %s22
        %p166 = scmp.lt.s32.totalorder %s21, 1
        %s167 = scalar_select %p166, %s21, 1
        %p168 = scmp.lt.s32.totalorder %s165, 1
        %s169 = scalar_select %p168, %s165, 1
        %s170 = smul.addr %s167, 2
        %s171 = sadd.s32 %s169, %s170
        %s172 = smul.addr %s171, 8
        %s173 = scalar_lea.vmem %s0, %s172
        %p174 = pneg %p58
        %p175 = pneg %p55
        %p176 = scmp.lt.s32.totalorder %s21, 1
        %s177 = scalar_select %p176, %s21, 1
        %p178 = scmp.lt.s32.totalorder %s23, 0
        %s179 = scalar_select %p178, %s23, 0
        %s180 = sadd.s32 %s179, %s177
        %s181 = smul.addr %s180, 4
        %s182 = scalar_lea.vmem %s1, %s181
        %p183 = pneg %p86
        %p184 = pneg %p83
        %p185 = pneg %p116
        %p186 = pneg %p113
        %s187 = sand.u32 %s103, 1
        %s188 = scalar_lea.sflag [#allocation3], %s187
        %s189 = sand.u32 %s103, 1
        %s190 = smul.addr %s189, 16
        %s191 = scalar_lea.vmem [#allocation2], %s190
        %s192 = smul.u32 2, %s22
        %p193 = scmp.lt.s32.totalorder %s21, 1
        %s194 = scalar_select %p193, %s21, 1
        %p195 = scmp.lt.s32.totalorder %s192, 1
        %s196 = scalar_select %p195, %s192, 1
        %s197 = smul.addr %s194, 2
        %s198 = sadd.s32 %s196, %s197
        %s199 = smul.addr %s198, 8
        %s200 = scalar_lea.vmem %s0, %s199
        %s201 = smul.u32 2, %s22
        %p202 = scmp.lt.s32.totalorder %s21, 1
        %s203 = scalar_select %p202, %s21, 1
        %p204 = scmp.lt.s32.totalorder %s23, 0
        %s205 = scalar_select %p204, %s23, 0
        %s206 = sadd.s32 %s205, %s203
        %s207 = smul.addr %s206, 4
        %s208 = scalar_lea.vmem %s1, %s207
        %s209 = smul.u32 2, %s22
        %v210 = vld [vmem:[%s200] sm:$0xff]
        %v211 = vld [vmem:[%s200 + $0x8] sm:$0xff]
        %v212 = vld [vmem:[%s208] sm:$0xf]
        %vm213 = vcmask 31744
        %v215 = vsel %vm213, %v210, 0
        %v218 = vsel %vm213, %v211, 0
        %vm220 = vcmask 1043456
        %v222 = vsel %vm220, %v212, 0
        %224 = vmatpush.msra.mxu0 0.0
        %225 = vmatpush.msra.mxu0 0.0
        %226 = vmatpush.msra.mxu0 0.0
        %227 = vmatpush.msra.mxu0 0.0
        %228 = vmatpush.msra.mxu0 0.0
        %229 = vmatpush.msra.mxu0 0.0
        %230 = vmatpush.msra.mxu0 0.0
        %231 = vmatpush.msra.mxu0 0.0
        %232 = vmatpush.msra.mxu0 0.0
        %233 = vmatpush.msra.mxu0 0.0
        %234 = vmatpush.msra.mxu0 0.0
        %235 = vmatpush.msra.mxu0 0.0
        %236 = vmatpush.msra.mxu0 0.0
        %237 = vmatpush.msra.mxu0 0.0
        %238 = vmatpush.msra.mxu0 0.0
        %239 = vmatpush.msra.mxu0 %v222
        %240 = vmatmul.f32.gmra.mxu0 %v215
        %v241 = vpop.f32.mrf.mxu0
        %v242 = vadd.f32 0.0, %v241
        %243 = vmatmul.f32.gmra.mxu0 %v218
        %v244 = vpop.f32.mrf.mxu0
        %v245 = vadd.f32 0.0, %v244
        %246 = vdwg.mxu0
        %vm247 = vcmask 130048
        %248 = vst.msk [vmem:[%s191] sm:$0xff] %vm247, %v242
        %249 = vst.msk [vmem:[%s191 + $0x8] sm:$0xff] %vm247, %v245
        %s250 = sand.u32 %s103, 1
        %s251 = scalar_lea.sflag [#allocation3], %s250
        %s252 = sand.u32 %s103, 1
        %s253 = smul.addr %s252, 16
        %s254 = scalar_lea.vmem [#allocation2], %s253
        // Predicated region
        $region29: #{tpu_custom_call.1} parent=27 // pred_check
          %p255 = pneg %p113
        $region30: #{tpu_custom_call.1} parent=27 // pred_check_branch
          %257 = sbr.rel (%p255) target = $region32
        $region31: #{tpu_custom_call.1} parent=27 // pred_region
          %s258 = smul.u32 2, %s22
          %260 = vsyncadd %s251, 0
          %s261 = sadd.s32 %s23, %s258
          %s262 = smul.addr %s21, 2
          %s263 = sadd.s32 %s261, %s262
          %s264 = smul.addr %s263, 8
          %s265 = scalar_lea.hbm %s2, %s264
          %s266 = sshll.u32 %s254, 4
          %s267 = int_to_ptr.vmem [resolvable:$true] %s266
          %s268 = sshll.u32 %s265, 4
          %s269 = int_to_ptr.hbm [resolvable:$true] %s268
          %274 = dma.vmem_to_hbm [thread:$0]  %s267, 256, %s269, %s251, 128, 128, 8
        $region32: #{tpu_custom_call.1} parent=27 // pred_fallthru
          _
      $region28: #{tpu_custom_call.1} parent=5 // pred_fallthru
        _
      %p275 = scmp.le.s32.totalorder 2, %s11
      // Predicated region
      $region33: #{tpu_custom_call.1} parent=5 // pred_check
        %p276 = pneg %p275
      $region34: #{tpu_custom_call.1} parent=5 // pred_check_branch
        %278 = sbr.rel (%p276) target = $region36
      $region35: #{tpu_custom_call.1} parent=5 // pred_region
        %s279 = ssub.s32 %s11, 2
        // Predicated region
        $region37: #{tpu_custom_call.1} parent=35 // pred_check
          %p280 = pneg %p119
        $region38: #{tpu_custom_call.1} parent=35 // pred_check_branch
          %282 = sbr.rel (%p280) target = $region40
        $region39: #{tpu_custom_call.1} parent=35 // pred_region
          %s283 = sand.u32 %s104, 1
          %s284 = scalar_lea.sflag [#allocation3], %s283
          %s285 = sand.u32 %s104, 1
          %s286 = smul.addr %s285, 16
          %s287 = scalar_lea.vmem [#allocation2], %s286
          %289 = dma.done %s284, 256
        $region40: #{tpu_custom_call.1} parent=35 // pred_fallthru
          _
      $region36: #{tpu_custom_call.1} parent=5 // pred_fallthru
        _
    $region6: #{tpu_custom_call.1} parent=1 // loop_footer
      %s15 = sadd.s32 1, %s11
    $region7: #{tpu_custom_call.1} parent=1 // loop_footer_branch
      %10 = sbr.rel target = $region3
    $region8: #{tpu_custom_call.1} parent=1 // loop_exit
      _
    %290 = vsyncpa [#allocation3], 1
    %s291 = scalar_lea.sflag [#allocation3], 1
    %292 = vsyncpa %s291, 1

</llo_original>
